<compile_context>
chip_gen: v7x
topology: tpu7x:2x2x1
jax: 0.10.0
libtpu: 0.0.40
codegen_flags: <defaults>
</compile_context>

<pallas_src>
import math

import jax
import jax.numpy as jnp
from jax.experimental import pallas as pl
from jax.experimental.pallas import tpu as pltpu

CIN, COUT, K, STRIDE, PAD = 8, 8, 9, 9, 9
ND = COUT * K * K          # 648 real output features per interior input pixel
TILE_M_MAX = 1024          # VMEM-comfortable on v5e/v6e/v7x; >=85% HBM roofline


def _round_up(v, m):
    return ((v + m - 1) // m) * m


def deconv_sigmoid_kernel(x_ref, w_ref, b_ref, o_ref):
    # x_ref: (tile_m, CIN) bf16 | w_ref: (CIN, 648) bf16 | b_ref: (1, 648) f32
    # o_ref: (tile_m, 648) bf16
    acc = jnp.dot(x_ref[...], w_ref[...], preferred_element_type=jnp.float32)
    y = (acc + b_ref[...]).astype(jnp.bfloat16)     # bf16 before EUP (v6e/v7x)
    t = jnp.exp(-y)
    # exact divide keeps sigmoid in [0, 1] (approx reciprocal can exceed 1.0)
    o_ref[...] = (1.0 / (1.0 + t)).astype(o_ref.dtype)


@jax.jit
def conv_transpose2d_sigmoid(x, weight, bias):
    """x: (N, Cin, Hi, Wi) f32; weight: (Cin, Cout, K, K) (PyTorch
    ConvTranspose2d layout); bias: (Cout,). Returns sigmoid(deconv(x)), NCHW f32."""
    N, Cin, Hi, Wi = x.shape
    assert Cin == CIN
    Ho = (Hi - 1) * STRIDE - 2 * PAD + K            # = K * (Hi - 2)
    Wo = (Wi - 1) * STRIDE - 2 * PAD + K            # = K * (Wi - 2)
    assert Ho > 0 and Wo > 0, "output spatial size must be positive"
    Hc, Wc = Hi - 2, Wi - 2                         # interior pixels only

    # ---- glue: flatten interior pixels to a matmul problem -----------------
    x_int = x[:, :, 1:1 + Hc, 1:1 + Wc]
    x2d = jnp.transpose(x_int, (0, 2, 3, 1)).reshape(N * Hc * Wc, CIN)  # (M, Cin)
    w2d = weight.reshape(CIN, ND).astype(jnp.bfloat16)                  # (Cin, 648)
    b2d = jnp.repeat(bias, K * K).reshape(1, ND).astype(jnp.float32)    # (1, 648)

    M = x2d.shape[0]
    m8 = _round_up(M, 8)
    if m8 <= TILE_M_MAX:
        tile_m, grid_m = m8, 1
    else:
        tile_m = TILE_M_MAX
        grid_m = _round_up(pl.cdiv(M, tile_m), 2)   # even grid -> both v7x TCs busy
    mp = tile_m * grid_m
    # padded rows are zeros -> sigmoid(bias) garbage, sliced off below (keep
    # that masking if this slice ever changes).
    x2d = jnp.pad(x2d, ((0, mp - M), (0, 0))).astype(jnp.bfloat16)

    out2d = pl.pallas_call(
        deconv_sigmoid_kernel,
        out_shape=jax.ShapeDtypeStruct((mp, ND), jnp.bfloat16),
        grid=(grid_m,),
        in_specs=[
            pl.BlockSpec((tile_m, CIN), lambda i: (i, 0)),
            pl.BlockSpec((CIN, ND), lambda i: (0, 0)),    # constant across grid
            pl.BlockSpec((1, ND), lambda i: (0, 0)),      # constant across grid
        ],
        out_specs=pl.BlockSpec((tile_m, ND), lambda i: (i, 0)),
        compiler_params=pltpu.CompilerParams(
            dimension_semantics=("parallel",),
            vmem_limit_bytes=32 * 1024 * 1024),
        cost_estimate=pl.CostEstimate(
            flops=2 * mp * CIN * ND,
            transcendentals=mp * ND,
            bytes_accessed=mp * CIN * 2 + CIN * ND * 2 + ND * 4 + mp * ND * 2),
    )(x2d, w2d, b2d)

    # ---- glue: un-tile (M, 648) -> NCHW in ONE XLA pass (f32 cast fused) ----
    full = out2d[:M].reshape(N, Hc, Wc, COUT, K, K)
    full = jnp.transpose(full, (0, 3, 1, 4, 2, 5)).reshape(N, COUT, Ho, Wo)
    return full.astype(jnp.float32)


if __name__ == "__main__":
    key = jax.random.PRNGKey(0)
    k1, k2, k3 = jax.random.split(key, 3)

    # Deterministic init mimicking PyTorch ConvTranspose2d defaults
    # (kaiming_uniform(a=sqrt(5)) -> U(-1/sqrt(fan_in), 1/sqrt(fan_in))).
    fan_in = COUT * K * K
    bound = 1.0 / math.sqrt(fan_in)
    weight = jax.random.uniform(k1, (CIN, COUT, K, K), jnp.float32, -bound, bound)
    bias = jax.random.uniform(k2, (COUT,), jnp.float32, -bound, bound)

    # NOTE: the original script's input (1, 8, 1, 1) gives a negative output
    # spatial size for these hyper-params (PyTorch raises at runtime -- this
    # module is from a jit_fail set).  We use a small valid spatial size.
    x = jax.random.normal(k3, (2, CIN, 6, 6), jnp.float32)

    out = jax.block_until_ready(conv_transpose2d_sigmoid(x, weight, bias))
    assert out.shape == (2, COUT, 36, 36), out.shape
    assert out.dtype == jnp.float32

    # Pure-JAX reference of the same deconv+sigmoid (interior-pixel form).
    x_int = x[:, :, 1:-1, 1:-1]
    ref = jnp.einsum("nchw,cokl->nohkwl", x_int, weight)
    ref = ref + bias[None, :, None, None, None, None]
    ref = jax.nn.sigmoid(ref).reshape(2, COUT, 36, 36)
    err = float(jnp.max(jnp.abs(out - ref)))
    assert err < 2e-2, f"max abs error {err}"   # bf16 matmul/sigmoid path
    assert bool(jnp.all(jnp.isfinite(out)))
    assert bool(jnp.all((out >= 0.0) & (out <= 1.0 + 1e-3)))
    print("KERNEL_OK")
</pallas_src>

<mosaic_0001>
module attributes {stable_mosaic.version = 11 : i64} {
  func.func @deconv_sigmoid_kernel(%arg0: i32, %arg1: memref<32x8xbf16, #tpu.memory_space<vmem>>, %arg2: memref<8x648xbf16, #tpu.memory_space<vmem>>, %arg3: memref<1x648xf32, #tpu.memory_space<vmem>>, %arg4: memref<32x648xbf16, #tpu.memory_space<vmem>>) attributes {dimension_semantics = [#tpu.dimension_semantics<parallel>], iteration_bounds = array<i64: 1>, scalar_prefetch = 0 : i64, scratch_operands = 0 : i64, tpu.core_type = #tpu.core_type<tc>, window_params = [{transform_indices = @transform_0, window_bounds = array<i64: 32, 8>}, {pipeline_mode = #tpu.pipeline_mode<synchronous>, transform_indices = @transform_1, window_bounds = array<i64: 8, 648>}, {pipeline_mode = #tpu.pipeline_mode<synchronous>, transform_indices = @transform_2, window_bounds = array<i64: 1, 648>}, {transform_indices = @transform_3, window_bounds = array<i64: 32, 648>}]} {
    %c0 = arith.constant 0 : index
    %c0_0 = arith.constant 0 : index
    %0 = vector.load %arg1[%c0, %c0_0] : memref<32x8xbf16, #tpu.memory_space<vmem>>, vector<32x8xbf16>
    %c0_1 = arith.constant 0 : index
    %c0_2 = arith.constant 0 : index
    %1 = vector.load %arg2[%c0_1, %c0_2] : memref<8x648xbf16, #tpu.memory_space<vmem>>, vector<8x648xbf16>
    %cst = arith.constant dense<0.000000e+00> : vector<32x648xf32>
    %2 = tpu.matmul %0, %1, %cst {dimension_numbers = #tpu.dot_dimension_numbers<[1], [0], [0], [1], [0, 0, 1, 1], [], []>} : vector<32x8xbf16>, vector<8x648xbf16>, vector<32x648xf32> -> vector<32x648xf32>
    %c0_3 = arith.constant 0 : index
    %c0_4 = arith.constant 0 : index
    %3 = vector.load %arg3[%c0_3, %c0_4] : memref<1x648xf32, #tpu.memory_space<vmem>>, vector<1x648xf32>
    %4 = vector.broadcast %3 : vector<1x648xf32> to vector<32x648xf32>
    %5 = arith.addf %2, %4 : vector<32x648xf32>
    %6 = arith.truncf %5 : vector<32x648xf32> to vector<32x648xbf16>
    %cst_5 = arith.constant 0.000000e+00 : bf16
    %7 = vector.broadcast %cst_5 : bf16 to vector<32x648xbf16>
    %8 = arith.subf %7, %6 : vector<32x648xbf16>
    %9 = math.exp %8 : vector<32x648xbf16>
    %cst_6 = arith.constant 1.000000e+00 : bf16
    %10 = vector.broadcast %cst_6 : bf16 to vector<32x648xbf16>
    %11 = arith.addf %10, %9 : vector<32x648xbf16>
    %cst_7 = arith.constant 1.000000e+00 : bf16
    %12 = vector.broadcast %cst_7 : bf16 to vector<32x648xbf16>
    %13 = arith.divf %12, %11 : vector<32x648xbf16>
    %c0_8 = arith.constant 0 : index
    %c0_9 = arith.constant 0 : index
    %14 = vector.load %arg4[%c0_8, %c0_9] : memref<32x648xbf16, #tpu.memory_space<vmem>>, vector<32x648xbf16>
    tpu.vector_store %arg4[%c0_8, %c0_9], %13 {strides = array<i32>} : memref<32x648xbf16, #tpu.memory_space<vmem>>, vector<32x648xbf16>,
    return
  }
  func.func @transform_0(%arg0: i32) -> (i32, i32) {
    %c0_i32 = arith.constant 0 : i32
    %c0_i32_0 = arith.constant 0 : i32
    return %arg0, %c0_i32 : i32, i32
  }
  func.func @transform_1(%arg0: i32) -> (i32, i32) {
    %c0_i32 = arith.constant 0 : i32
    %c0_i32_0 = arith.constant 0 : i32
    %c0_i32_1 = arith.constant 0 : i32
    return %c0_i32, %c0_i32_0 : i32, i32
  }
  func.func @transform_2(%arg0: i32) -> (i32, i32) {
    %c0_i32 = arith.constant 0 : i32
    %c0_i32_0 = arith.constant 0 : i32
    %c0_i32_1 = arith.constant 0 : i32
    return %c0_i32, %c0_i32_0 : i32, i32
  }
  func.func @transform_3(%arg0: i32) -> (i32, i32) {
    %c0_i32 = arith.constant 0 : i32
    %c0_i32_0 = arith.constant 0 : i32
    return %arg0, %c0_i32 : i32, i32
  }
}

</mosaic_0001>

<llo_original>
// kernel: conv_transpose2d_sigmoid.1
$region0: #{conv_transpose2d_sigmoid.1}
  #allocation0 [shape = 'u32[]', space=smem, size = 0x4, offset = 0x4, fixed_abs, tag = 'smem constant byte address 0x4 - core index']
  #allocation1 [shape = 'u32[144,128]{1,0:T(1,128)}', space=vmem, size = 0x12000, scoped, tag = 'internal scratch']
  %s0 = inlined_call_operand.vmem [shape: bf16[32,8], index: 0, kind: input, shape index: {}]
  %s1 = inlined_call_operand.vmem [shape: bf16[8,648], index: 1, kind: input, shape index: {}]
  %s2 = inlined_call_operand.vmem [shape: f32[1,648], index: 2, kind: input, shape index: {}]
  %s3 = inlined_call_operand.vmem [shape: bf16[32,648], index: 3, kind: output, shape index: {}]
  %s4 = sld [smem:[#allocation0]]
  $region22: #{conv_transpose2d_sigmoid.1} parent=0
    _
  %s6 = ssub.s32 1, %s4
  %s7 = scalar_select 0, %s6, %s4
  // Predicated region
  $region2: #{conv_transpose2d_sigmoid.1} parent=0 // pred_check
    _
  $region3: #{conv_transpose2d_sigmoid.1} parent=0 // pred_check_branch
    %9 = sbr.rel (0) target = $region5
  $region4: #{conv_transpose2d_sigmoid.1} parent=0 // pred_region
    _
  $region5: #{conv_transpose2d_sigmoid.1} parent=0 // pred_fallthru
    _
  // Predicated region
  $region6: #{conv_transpose2d_sigmoid.1} parent=0 // pred_check
    _
  $region7: #{conv_transpose2d_sigmoid.1} parent=0 // pred_check_branch
    %11 = sbr.rel (0) target = $region9
  $region8: #{conv_transpose2d_sigmoid.1} parent=0 // pred_region
    _
  $region9: #{conv_transpose2d_sigmoid.1} parent=0 // pred_fallthru
    _
  // Predicated region
  $region10: #{conv_transpose2d_sigmoid.1} parent=0 // pred_check
    _
  $region11: #{conv_transpose2d_sigmoid.1} parent=0 // pred_check_branch
    %13 = sbr.rel (0) target = $region13
  $region12: #{conv_transpose2d_sigmoid.1} parent=0 // pred_region
    _
  $region13: #{conv_transpose2d_sigmoid.1} parent=0 // pred_fallthru
    _
  %v16 = vld [vmem:[%s0] sm:$0xf]
  %v17 = vld [vmem:[%s0 + $0x4] sm:$0xf]
  %v18 = vld [vmem:[%s0 + $0x8] sm:$0xf]
  %v19 = vld [vmem:[%s0 + $0xc] sm:$0xf]
  %v20 = vld [vmem:[%s1] sm:$0xff]
  %v21 = vld [vmem:[%s1 + $0x8] sm:$0xff]
  %v22 = vld [vmem:[%s1 + $0x10] sm:$0xff]
  %v23 = vld [vmem:[%s2] sm:$0x3f]
  %v25 = vlaneseq
  %v26 = vshrl.u32 %v25, 7
  %v27 = vsub.s32 0, %v26
  %v28 = vrot.slane %v23, %v27
  %v29 = vlaneseq
  %v30 = vshrl.u32 %v29, 7
  %v31 = vsub.s32 1, %v30
  %v32 = vrot.slane %v23, %v31
  %v33 = vlaneseq
  %v34 = vshrl.u32 %v33, 7
  %v35 = vsub.s32 2, %v34
  %v36 = vrot.slane %v23, %v35
  %v37 = vlaneseq
  %v38 = vshrl.u32 %v37, 7
  %v39 = vsub.s32 3, %v38
  %v40 = vrot.slane %v23, %v39
  %v41 = vlaneseq
  %v42 = vshrl.u32 %v41, 7
  %v43 = vsub.s32 4, %v42
  %v44 = vrot.slane %v23, %v43
  %v45 = vlaneseq
  %v46 = vshrl.u32 %v45, 7
  %v47 = vsub.s32 5, %v46
  %v48 = vrot.slane %v23, %v47
  %v59 = vunpack.c.l.b16 %v16
  %v60 = vunpack.c.l.b16 %v17
  %v61 = vunpack.c.l.b16 %v18
  %v62 = vunpack.c.l.b16 %v19
  %v63 = vpack.c.b16 %v60, %v59
  %v64 = vpack.c.b16 %v62, %v61
  %v68 = vunpack.c.l.b16 %v20
  %v69 = vunpack.c.h.b16 %v20
  %v70 = vunpack.c.l.b16 %v21
  %v71 = vunpack.c.h.b16 %v21
  %v72 = vunpack.c.l.b16 %v22
  %v73 = vunpack.c.h.b16 %v22
  %v74 = vpack.c.b16 %v68, %v68
  %v75 = vpack.c.b16 %v69, %v69
  %v76 = vpack.c.b16 %v70, %v70
  %v77 = vpack.c.b16 %v71, %v71
  %v78 = vpack.c.b16 %v72, %v72
  %v79 = vpack.c.b16 %v73, %v73
  %vm80 = vcmask 64512
  %v82 = vsel %vm80, %v63, 0
  %v85 = vsel %vm80, %v64, 0
  %vm87 = vcmask 1043456
  %v89 = vsel %vm87, %v74, 0
  %v92 = vsel %vm87, %v75, 0
  %v95 = vsel %vm87, %v76, 0
  %v98 = vsel %vm87, %v77, 0
  %v101 = vsel %vm87, %v78, 0
  %v104 = vsel %vm87, %v79, 0
  %106 = vmatprep.subr.bf16.mxu0 %v92
  %107 = vmatpush1.bf16.msra.mxu0 %v89
  %108 = vmatprep.subr.bf16.mxu0 0
  %109 = vmatpush1.bf16.msra.mxu0 0
  %110 = vmatprep.subr.bf16.mxu0 0
  %111 = vmatpush1.bf16.msra.mxu0 0
  %112 = vmatprep.subr.bf16.mxu0 0
  %113 = vmatpush1.bf16.msra.mxu0 0
  %114 = vmatprep.subr.bf16.mxu0 0
  %115 = vmatpush1.bf16.msra.mxu0 0
  %116 = vmatprep.subr.bf16.mxu0 0
  %117 = vmatpush1.bf16.msra.mxu0 0
  %118 = vmatprep.subr.bf16.mxu0 0
  %119 = vmatpush1.bf16.msra.mxu0 0
  %120 = vmatprep.subr.bf16.mxu0 0
  %121 = vmatpush1.bf16.msra.mxu0 0
  %122 = vmatprep.subr.bf16.mxu0 0
  %123 = vmatpush1.bf16.msra.mxu0 0
  %124 = vmatprep.subr.bf16.mxu0 0
  %125 = vmatpush1.bf16.msra.mxu0 0
  %126 = vmatprep.subr.bf16.mxu0 0
  %127 = vmatpush1.bf16.msra.mxu0 0
  %128 = vmatprep.subr.bf16.mxu0 0
  %129 = vmatpush1.bf16.msra.mxu0 0
  %130 = vmatprep.subr.bf16.mxu0 0
  %131 = vmatpush1.bf16.msra.mxu0 0
  %132 = vmatprep.subr.bf16.mxu0 0
  %133 = vmatpush1.bf16.msra.mxu0 0
  %134 = vmatprep.subr.bf16.mxu0 0
  %135 = vmatpush1.bf16.msra.mxu0 0
  %136 = vmatprep.subr.bf16.mxu0 0
  %137 = vmatpush1.bf16.msra.mxu0 0
  %138 = vmatprep.mubr.bf16.mxu0 0
  %139 = vmatmul.mubr.bf16.gmra.mrb[0].mxu0 %v82
  %v140 = vpop.f32.mrb[0].mxu0
  %v141 = vadd.f32 %v28, %v140
  %v142 = vpop.f32.mrb[0].mxu0
  %v143 = vadd.f32 %v32, %v142
  %v144 = vpop.f32.mrb[0].mxu0
  %v145 = vadd.f32 %v28, %v144
  %v146 = vpop.f32.mrb[0].mxu0
  %v147 = vadd.f32 %v32, %v146
  %148 = vmatprep.mubr.bf16.mxu0 0
  %149 = vmatmul.mubr.bf16.gmra.mrb[0].mxu0 %v85
  %v150 = vpop.f32.mrb[0].mxu0
  %v151 = vadd.f32 %v28, %v150
  %v152 = vpop.f32.mrb[0].mxu0
  %v153 = vadd.f32 %v32, %v152
  %v154 = vpop.f32.mrb[0].mxu0
  %v155 = vadd.f32 %v28, %v154
  %v156 = vpop.f32.mrb[0].mxu0
  %v157 = vadd.f32 %v32, %v156
  %158 = vdwg.mxu0
  %159 = vmatprep.subr.bf16.mxu0 %v98
  %160 = vmatpush1.bf16.msra.mxu0 %v95
  %161 = vmatprep.subr.bf16.mxu0 0
  %162 = vmatpush1.bf16.msra.mxu0 0
  %163 = vmatprep.subr.bf16.mxu0 0
  %164 = vmatpush1.bf16.msra.mxu0 0
  %165 = vmatprep.subr.bf16.mxu0 0
  %166 = vmatpush1.bf16.msra.mxu0 0
  %167 = vmatprep.subr.bf16.mxu0 0
  %168 = vmatpush1.bf16.msra.mxu0 0
  %169 = vmatprep.subr.bf16.mxu0 0
  %170 = vmatpush1.bf16.msra.mxu0 0
  %171 = vmatprep.subr.bf16.mxu0 0
  %172 = vmatpush1.bf16.msra.mxu0 0
  %173 = vmatprep.subr.bf16.mxu0 0
  %174 = vmatpush1.bf16.msra.mxu0 0
  %175 = vmatprep.subr.bf16.mxu0 0
  %176 = vmatpush1.bf16.msra.mxu0 0
  %177 = vmatprep.subr.bf16.mxu0 0
  %178 = vmatpush1.bf16.msra.mxu0 0
  %179 = vmatprep.subr.bf16.mxu0 0
  %180 = vmatpush1.bf16.msra.mxu0 0
  %181 = vmatprep.subr.bf16.mxu0 0
  %182 = vmatpush1.bf16.msra.mxu0 0
  %183 = vmatprep.subr.bf16.mxu0 0
  %184 = vmatpush1.bf16.msra.mxu0 0
  %185 = vmatprep.subr.bf16.mxu0 0
  %186 = vmatpush1.bf16.msra.mxu0 0
  %187 = vmatprep.subr.bf16.mxu0 0
  %188 = vmatpush1.bf16.msra.mxu0 0
  %189 = vmatprep.subr.bf16.mxu0 0
  %190 = vmatpush1.bf16.msra.mxu0 0
  %191 = vmatprep.mubr.bf16.mxu0 0
  %192 = vmatmul.mubr.bf16.gmra.mrb[0].mxu0 %v82
  %v193 = vpop.f32.mrb[0].mxu0
  %v194 = vadd.f32 %v36, %v193
  %v195 = vpop.f32.mrb[0].mxu0
  %v196 = vadd.f32 %v40, %v195
  %v197 = vpop.f32.mrb[0].mxu0
  %v198 = vadd.f32 %v36, %v197
  %v199 = vpop.f32.mrb[0].mxu0
  %v200 = vadd.f32 %v40, %v199
  %201 = vmatprep.mubr.bf16.mxu0 0
  %202 = vmatmul.mubr.bf16.gmra.mrb[0].mxu0 %v85
  %v203 = vpop.f32.mrb[0].mxu0
  %v204 = vadd.f32 %v36, %v203
  %v205 = vpop.f32.mrb[0].mxu0
  %v206 = vadd.f32 %v40, %v205
  %v207 = vpop.f32.mrb[0].mxu0
  %v208 = vadd.f32 %v36, %v207
  %v209 = vpop.f32.mrb[0].mxu0
  %v210 = vadd.f32 %v40, %v209
  %211 = vdwg.mxu0
  %212 = vmatprep.subr.bf16.mxu0 %v104
  %213 = vmatpush1.bf16.msra.mxu0 %v101
  %214 = vmatprep.subr.bf16.mxu0 0
  %215 = vmatpush1.bf16.msra.mxu0 0
  %216 = vmatprep.subr.bf16.mxu0 0
  %217 = vmatpush1.bf16.msra.mxu0 0
  %218 = vmatprep.subr.bf16.mxu0 0
  %219 = vmatpush1.bf16.msra.mxu0 0
  %220 = vmatprep.subr.bf16.mxu0 0
  %221 = vmatpush1.bf16.msra.mxu0 0
  %222 = vmatprep.subr.bf16.mxu0 0
  %223 = vmatpush1.bf16.msra.mxu0 0
  %224 = vmatprep.subr.bf16.mxu0 0
  %225 = vmatpush1.bf16.msra.mxu0 0
  %226 = vmatprep.subr.bf16.mxu0 0
  %227 = vmatpush1.bf16.msra.mxu0 0
  %228 = vmatprep.subr.bf16.mxu0 0
  %229 = vmatpush1.bf16.msra.mxu0 0
  %230 = vmatprep.subr.bf16.mxu0 0
  %231 = vmatpush1.bf16.msra.mxu0 0
  %232 = vmatprep.subr.bf16.mxu0 0
  %233 = vmatpush1.bf16.msra.mxu0 0
  %234 = vmatprep.subr.bf16.mxu0 0
  %235 = vmatpush1.bf16.msra.mxu0 0
  %236 = vmatprep.subr.bf16.mxu0 0
  %237 = vmatpush1.bf16.msra.mxu0 0
  %238 = vmatprep.subr.bf16.mxu0 0
  %239 = vmatpush1.bf16.msra.mxu0 0
  %240 = vmatprep.subr.bf16.mxu0 0
  %241 = vmatpush1.bf16.msra.mxu0 0
  %242 = vmatprep.subr.bf16.mxu0 0
  %243 = vmatpush1.bf16.msra.mxu0 0
  %244 = vmatprep.mubr.bf16.mxu0 0
  %245 = vmatmul.mubr.bf16.gmra.mrb[0].mxu0 %v82
  %v246 = vpop.f32.mrb[0].mxu0
  %v247 = vadd.f32 %v44, %v246
  %v248 = vpop.f32.mrb[0].mxu0
  %v249 = vadd.f32 %v48, %v248
  %v250 = vpop.f32.mrb[0].mxu0
  %v251 = vadd.f32 %v44, %v250
  %v252 = vpop.f32.mrb[0].mxu0
  %v253 = vadd.f32 %v48, %v252
  %254 = vmatprep.mubr.bf16.mxu0 0
  %255 = vmatmul.mubr.bf16.gmra.mrb[0].mxu0 %v85
  %v256 = vpop.f32.mrb[0].mxu0
  %v257 = vadd.f32 %v44, %v256
  %v258 = vpop.f32.mrb[0].mxu0
  %v259 = vadd.f32 %v48, %v258
  %v260 = vpop.f32.mrb[0].mxu0
  %v261 = vadd.f32 %v44, %v260
  %v262 = vpop.f32.mrb[0].mxu0
  %v263 = vadd.f32 %v48, %v262
  %264 = vdwg.mxu0
  %v265 = vpack.c.bf16 %v145, %v141
  %v266 = vpack.c.bf16 %v147, %v143
  %v267 = vpack.c.bf16 %v198, %v194
  %v268 = vpack.c.bf16 %v200, %v196
  %v269 = vpack.c.bf16 %v251, %v247
  %v270 = vpack.c.bf16 %v253, %v249
  %v271 = vpack.c.bf16 %v155, %v151
  %v272 = vpack.c.bf16 %v157, %v153
  %v273 = vpack.c.bf16 %v208, %v204
  %v274 = vpack.c.bf16 %v210, %v206
  %v275 = vpack.c.bf16 %v261, %v257
  %v276 = vpack.c.bf16 %v263, %v259
  %v277 = vsub.bf16 0, %v265
  %v278 = vsub.bf16 0, %v266
  %v279 = vsub.bf16 0, %v267
  %v280 = vsub.bf16 0, %v268
  %v281 = vsub.bf16 0, %v269
  %v282 = vsub.bf16 0, %v270
  %v283 = vsub.bf16 0, %v271
  %v284 = vsub.bf16 0, %v272
  %v285 = vsub.bf16 0, %v273
  %v286 = vsub.bf16 0, %v274
  %v287 = vsub.bf16 0, %v275
  %v288 = vsub.bf16 0, %v276
  %v290 = vmul.bf16 %v277, 1069105081
  %v291 = vpow.bf16.pop %v290
  %v293 = vmul.bf16 %v278, 1069105081
  %v294 = vpow.bf16.pop %v293
  %v296 = vmul.bf16 %v279, 1069105081
  %v297 = vpow.bf16.pop %v296
  %v299 = vmul.bf16 %v280, 1069105081
  %v300 = vpow.bf16.pop %v299
  %v302 = vmul.bf16 %v281, 1069105081
  %v303 = vpow.bf16.pop %v302
  %v305 = vmul.bf16 %v282, 1069105081
  %v306 = vpow.bf16.pop %v305
  %v308 = vmul.bf16 %v283, 1069105081
  %v309 = vpow.bf16.pop %v308
  %v311 = vmul.bf16 %v284, 1069105081
  %v312 = vpow.bf16.pop %v311
  %v314 = vmul.bf16 %v285, 1069105081
  %v315 = vpow.bf16.pop %v314
  %v317 = vmul.bf16 %v286, 1069105081
  %v318 = vpow.bf16.pop %v317
  %v320 = vmul.bf16 %v287, 1069105081
  %v321 = vpow.bf16.pop %v320
  %v323 = vmul.bf16 %v288, 1069105081
  %v324 = vpow.bf16.pop %v323
  %v325 = vadd.bf16 %v291, 1065369472
  %v326 = vadd.bf16 %v294, 1065369472
  %v327 = vadd.bf16 %v297, 1065369472
  %v328 = vadd.bf16 %v300, 1065369472
  %v329 = vadd.bf16 %v303, 1065369472
  %v330 = vadd.bf16 %v306, 1065369472
  %v331 = vadd.bf16 %v309, 1065369472
  %v332 = vadd.bf16 %v312, 1065369472
  %v333 = vadd.bf16 %v315, 1065369472
  %v334 = vadd.bf16 %v318, 1065369472
  %v335 = vadd.bf16 %v321, 1065369472
  %v336 = vadd.bf16 %v324, 1065369472
  %v337 = vrcp.bf16.pop %v325
  %v338 = vmul.bf16 1065369472, %v337
  %v339 = vrcp.bf16.pop %v326
  %v340 = vmul.bf16 1065369472, %v339
  %v341 = vrcp.bf16.pop %v327
  %v342 = vmul.bf16 1065369472, %v341
  %v343 = vrcp.bf16.pop %v328
  %v344 = vmul.bf16 1065369472, %v343
  %v345 = vrcp.bf16.pop %v329
  %v346 = vmul.bf16 1065369472, %v345
  %v347 = vrcp.bf16.pop %v330
  %v348 = vmul.bf16 1065369472, %v347
  %v349 = vrcp.bf16.pop %v331
  %v350 = vmul.bf16 1065369472, %v349
  %v351 = vrcp.bf16.pop %v332
  %v352 = vmul.bf16 1065369472, %v351
  %v353 = vrcp.bf16.pop %v333
  %v354 = vmul.bf16 1065369472, %v353
  %v355 = vrcp.bf16.pop %v334
  %v356 = vmul.bf16 1065369472, %v355
  %v357 = vrcp.bf16.pop %v335
  %v358 = vmul.bf16 1065369472, %v357
  %v359 = vrcp.bf16.pop %v336
  %v360 = vmul.bf16 1065369472, %v359
  %v373 = vunpack.c.l.b16 %v338
  %v374 = vunpack.c.l.b16 %v340
  %v375 = vunpack.c.l.b16 %v342
  %v376 = vunpack.c.l.b16 %v344
  %v377 = vunpack.c.l.b16 %v346
  %v378 = vunpack.c.l.b16 %v348
  %v379 = vunpack.c.h.b16 %v338
  %v380 = vunpack.c.h.b16 %v340
  %v381 = vunpack.c.h.b16 %v342
  %v382 = vunpack.c.h.b16 %v344
  %v383 = vunpack.c.h.b16 %v346
  %v384 = vunpack.c.h.b16 %v348
  %v385 = vunpack.c.l.b16 %v350
  %v386 = vunpack.c.l.b16 %v352
  %v387 = vunpack.c.l.b16 %v354
  %v388 = vunpack.c.l.b16 %v356
  %v389 = vunpack.c.l.b16 %v358
  %v390 = vunpack.c.l.b16 %v360
  %v391 = vunpack.c.h.b16 %v350
  %v392 = vunpack.c.h.b16 %v352
  %v393 = vunpack.c.h.b16 %v354
  %v394 = vunpack.c.h.b16 %v356
  %v395 = vunpack.c.h.b16 %v358
  %v396 = vunpack.c.h.b16 %v360
  %v397 = vpack.c.b16 %v374, %v373
  %v398 = vpack.c.b16 %v376, %v375
  %v399 = vpack.c.b16 %v378, %v377
  %v400 = vpack.c.b16 %v380, %v379
  %v401 = vpack.c.b16 %v382, %v381
  %v402 = vpack.c.b16 %v384, %v383
  %v403 = vpack.c.b16 %v386, %v385
  %v404 = vpack.c.b16 %v388, %v387
  %v405 = vpack.c.b16 %v390, %v389
  %v406 = vpack.c.b16 %v392, %v391
  %v407 = vpack.c.b16 %v394, %v393
  %v408 = vpack.c.b16 %v396, %v395
  %421 = vst [vmem:[%s3] sm:$0xff] %v397
  %422 = vst [vmem:[%s3 + $0x8] sm:$0xff] %v398
  %vm423 = vcmask 64516
  %vm424 = vmor %vm423, %vm87
  %425 = vst.msk [vmem:[%s3 + $0x10] sm:$0xff] %vm424, %v399
  %426 = vst [vmem:[%s3 + $0x18] sm:$0xff] %v400
  %427 = vst [vmem:[%s3 + $0x20] sm:$0xff] %v401
  %428 = vst.msk [vmem:[%s3 + $0x28] sm:$0xff] %vm424, %v402
  %429 = vst [vmem:[%s3 + $0x30] sm:$0xff] %v403
  %430 = vst [vmem:[%s3 + $0x38] sm:$0xff] %v404
  %431 = vst.msk [vmem:[%s3 + $0x40] sm:$0xff] %vm424, %v405
  %432 = vst [vmem:[%s3 + $0x48] sm:$0xff] %v406
  %433 = vst [vmem:[%s3 + $0x50] sm:$0xff] %v407
  %434 = vst.msk [vmem:[%s3 + $0x58] sm:$0xff] %vm424, %v408
  // Predicated region
  $region14: #{conv_transpose2d_sigmoid.1} parent=0 // pred_check
    _
  $region15: #{conv_transpose2d_sigmoid.1} parent=0 // pred_check_branch
    %436 = sbr.rel (0) target = $region17
  $region16: #{conv_transpose2d_sigmoid.1} parent=0 // pred_region
    _
  $region17: #{conv_transpose2d_sigmoid.1} parent=0 // pred_fallthru
    _
  // Predicated region
  $region18: #{conv_transpose2d_sigmoid.1} parent=0 // pred_check
    _
  $region19: #{conv_transpose2d_sigmoid.1} parent=0 // pred_check_branch
    %438 = sbr.rel (0) target = $region21
  $region20: #{conv_transpose2d_sigmoid.1} parent=0 // pred_region
    _
  $region21: #{conv_transpose2d_sigmoid.1} parent=0 // pred_fallthru
    _

</llo_original>
